<compile_context>
chip_gen: v7x
topology: tpu7x:2x2x1
jax: 0.10.0
libtpu: 0.0.40
codegen_flags: <defaults>
</compile_context>

<pallas_src>
import jax
import jax.numpy as jnp
from jax import lax
from jax.experimental import pallas as pl
from jax.experimental.pallas import tpu as pltpu


def _round_up(x: int, m: int) -> int:
    return ((x + m - 1) // m) * m


def _cdiv(a: int, b: int) -> int:
    return (a + b - 1) // b


_N_CORES = 2  # leading "parallel" grid axis (both TCs on v7x)


def _physical_vmem_bytes() -> int:
    try:
        v = getattr(pltpu.get_tpu_info(), "vmem_capacity_bytes", None)
        if v:
            return int(v)
    except Exception:
        pass
    return 64 * 1024 * 1024  # v7x floor -> safe everywhere


def _as_float(x):
    # keep native floating dtypes (bf16 stays bf16 -> half the HBM bytes);
    # promote bool/int targets so kernel math is well-typed.
    x = jnp.asarray(x)
    return x if jnp.issubdtype(x.dtype, jnp.floating) else x.astype(jnp.float32)


def _to_lane_dense(x):
    """[B, S] (any rank) -> [ceil(N/128), 128] with zero tail padding."""
    flat = x.reshape(-1)
    n = int(flat.shape[0])
    rows = max(1, _cdiv(n, 128))
    padded = rows * 128
    if padded != n:
        flat = jnp.pad(flat, (0, padded - n))
    return flat.reshape(rows, 128)


def _pad_rows(x, rows):
    pad = rows - x.shape[0]
    if pad:
        x = jnp.pad(x, ((0, pad),) + ((0, 0),) * (x.ndim - 1))
    return x


def _make_kernel(*, have_cls, have_bnd, have_con, block_cls, n_cls,
                 padded_cls, nb):
    """Fused numerator-sum kernel, specialized on which tasks are present."""

    def kernel(*refs):
        idx = 0
        labels_ref = logits_ref = bp_ref = bt_ref = cp_ref = ct_ref = None
        if have_cls:
            labels_ref, logits_ref = refs[idx], refs[idx + 1]; idx += 2
        if have_bnd:
            bp_ref, bt_ref = refs[idx], refs[idx + 1]; idx += 2
        if have_con:
            cp_ref, ct_ref = refs[idx], refs[idx + 1]; idx += 2
        out_ref = refs[idx]; idx += 1
        scratch = list(refs[idx:])

        si = 0
        acc_cls = acc_bnd = acc_con = None
        if have_cls:
            acc_cls = scratch[si]; si += 1
        if have_bnd:
            acc_bnd = scratch[si]; si += 1
        if have_con:
            acc_con = scratch[si]; si += 1

        c = pl.program_id(0)           # core split (parallel)
        i = pl.program_id(1)           # reduction steps (arbitrary)
        nsteps = pl.num_programs(1)

        @pl.when(i == 0)
        def _init():
            if have_cls:
                acc_cls[...] = jnp.zeros_like(acc_cls)
            if have_bnd:
                acc_bnd[...] = jnp.zeros_like(acc_bnd)
            if have_con:
                acc_con[...] = jnp.zeros_like(acc_con)

        # ---- classification: CrossEntropy numerator (per-row NLL) ----------
        if have_cls:
            logits = logits_ref[...].astype(jnp.float32)         # [bc, C]
            labels = labels_ref[...]                             # [bc, 1] i32
            ncol = logits.shape[-1]
            col = lax.broadcasted_iota(jnp.int32, (block_cls, ncol), 1)
            picked = jnp.sum(jnp.where(col == labels, logits, 0.0),
                             axis=-1, keepdims=True)             # [bc, 1]
            m = jnp.max(logits, axis=-1, keepdims=True)
            lse = m + jnp.log(jnp.sum(jnp.exp(logits - m),
                                      axis=-1, keepdims=True))
            nll = lse - picked                                   # [bc, 1]
            if padded_cls > n_cls:                               # static branch
                rows = ((c * nb + i) * block_cls
                        + lax.broadcasted_iota(jnp.int32, (block_cls, 1), 0))
                nll = jnp.where(rows < n_cls, nll, 0.0)
            acc_cls[...] += nll                                  # VPU only

        # ---- boundary: BCE numerator (lane-dense, zero pad contributes 0) --
        if have_bnd:
            p = bp_ref[...].astype(jnp.float32)                  # [bb, 128]
            y = bt_ref[...].astype(jnp.float32)
            log_p = jnp.maximum(jnp.log(p), -100.0)              # torch clamp
            log_q = jnp.maximum(jnp.log(1.0 - p), -100.0)
            elem = -(y * log_p + (1.0 - y) * log_q)
            acc_bnd[...] += jnp.sum(elem, axis=0, keepdims=True)  # [1, 128]

        # ---- consistency: MSE numerator ------------------------------------
        if have_con:
            d = (cp_ref[...].astype(jnp.float32)
                 - ct_ref[...].astype(jnp.float32))
            acc_con[...] += jnp.sum(d * d, axis=0, keepdims=True)  # [1, 128]

        # ---- finalize: full reduce once per core, lane-dense VMEM store ----
        @pl.when(i == nsteps - 1)
        def _finalize():
            lane = lax.broadcasted_iota(jnp.int32, (8, 128), 1)
            sub = lax.broadcasted_iota(jnp.int32, (8, 128), 0)
            vec = jnp.zeros((8, 128), jnp.float32)
            if have_cls:
                vec = jnp.where((sub == 0) & (lane == 0),
                                jnp.sum(acc_cls[...]), vec)
            if have_bnd:
                vec = jnp.where((sub == 0) & (lane == 1),
                                jnp.sum(acc_bnd[...]), vec)
            if have_con:
                vec = jnp.where((sub == 0) & (lane == 2),
                                jnp.sum(acc_con[...]), vec)
            out_ref[0] = vec

    return kernel


def _run_fused_sums(labels, logits, bpred2d, btrue2d, cpred2d, ctrue2d,
                    *, have_cls, have_bnd, have_con, n_cls):
    """Returns the three (un-normalized) loss numerators as jnp scalars."""
    # ---- VMEM budget with lane-padded widths and real dtypes ---------------
    phys = _physical_vmem_bytes()
    block_budget = phys // 4           # input blocks per step (pre double-buf)
    vmem_limit = int(phys * 3 // 4)

    total_bytes = 0
    if have_cls:
        c_width = int(logits.shape[1])
        cls_rows = _round_up(max(n_cls, 1), 8)
        total_bytes += cls_rows * (_round_up(c_width, 128)
                                   * logits.dtype.itemsize + 128 * 4)
    if have_bnd:
        total_bytes += bpred2d.shape[0] * 128 * (bpred2d.dtype.itemsize
                                                 + btrue2d.dtype.itemsize)
    if have_con:
        total_bytes += cpred2d.shape[0] * 128 * (cpred2d.dtype.itemsize
                                                 + ctrue2d.dtype.itemsize)

    grid_needed = max(1, _cdiv(2 * total_bytes, block_budget))  # 2x dbl buffer
    nb = max(1, _cdiv(grid_needed, _N_CORES))
    grid_total = _N_CORES * nb

    inputs, in_specs, scratch_shapes = [], [], []
    idx_map = lambda c, i, nb=nb: (c * nb + i, 0)

    block_cls, padded_cls = 8, 8
    flops, transc = 0, 0
    if have_cls:
        c_width = int(logits.shape[1])
        block_cls = max(8, _round_up(_cdiv(max(n_cls, 1), grid_total), 8))
        padded_cls = block_cls * grid_total
        labels = _pad_rows(labels, padded_cls)
        logits = _pad_rows(logits, padded_cls)
        inputs += [labels, logits]
        in_specs += [pl.BlockSpec((block_cls, 1), idx_map),
                     pl.BlockSpec((block_cls, c_width), idx_map)]
        scratch_shapes.append(pltpu.VMEM((block_cls, 1), jnp.float32))
        flops += padded_cls * 6 * c_width
        transc += padded_cls * (c_width + 1)
    if have_bnd:
        block_bnd = max(8, _round_up(_cdiv(bpred2d.shape[0], grid_total), 8))
        padded_bnd = block_bnd * grid_total
        bpred2d = _pad_rows(bpred2d, padded_bnd)
        btrue2d = _pad_rows(btrue2d, padded_bnd)
        inputs += [bpred2d, btrue2d]
        in_specs += [pl.BlockSpec((block_bnd, 128), idx_map)] * 2
        scratch_shapes.append(pltpu.VMEM((1, 128), jnp.float32))
        flops += 8 * int(bpred2d.size)
        transc += 2 * int(bpred2d.size)
    if have_con:
        block_con = max(8, _round_up(_cdiv(cpred2d.shape[0], grid_total), 8))
        padded_con = block_con * grid_total
        cpred2d = _pad_rows(cpred2d, padded_con)
        ctrue2d = _pad_rows(ctrue2d, padded_con)
        inputs += [cpred2d, ctrue2d]
        in_specs += [pl.BlockSpec((block_con, 128), idx_map)] * 2
        scratch_shapes.append(pltpu.VMEM((1, 128), jnp.float32))
        flops += 4 * int(cpred2d.size)

    out_spec = pl.BlockSpec((1, 8, 128), lambda c, i: (c, 0, 0))
    kernel = _make_kernel(have_cls=have_cls, have_bnd=have_bnd,
                          have_con=have_con, block_cls=block_cls,
                          n_cls=n_cls, padded_cls=padded_cls, nb=nb)

    bytes_in = sum(int(a.size) * a.dtype.itemsize for a in inputs)
    cost = pl.CostEstimate(flops=int(flops), transcendentals=int(transc),
                           bytes_accessed=int(bytes_in + _N_CORES * 8 * 128 * 4))

    out = pl.pallas_call(
        kernel,
        out_shape=jax.ShapeDtypeStruct((_N_CORES, 8, 128), jnp.float32),
        grid_spec=pltpu.PrefetchScalarGridSpec(
            num_scalar_prefetch=0,
            grid=(_N_CORES, nb),
            in_specs=in_specs,
            out_specs=out_spec,
            scratch_shapes=scratch_shapes),
        compiler_params=pltpu.CompilerParams(
            dimension_semantics=("parallel", "arbitrary"),
            vmem_limit_bytes=vmem_limit),
        cost_estimate=cost,
    )(*inputs)

    sums = out[:, 0, :3].sum(axis=0)          # combine the two per-core partials
    return sums[0], sums[1], sums[2]


class MultiTaskLoss:
    """JAX/Pallas mirror of the PyTorch MultiTaskLoss module (forward only)."""

    def __init__(self, classification_weight: float = 1.0,
                 boundary_weight: float = 1.0,
                 consistency_weight: float = 1.0,
                 adaptive_weights: bool = True):
        self.classification_weight = jnp.float32(classification_weight)
        self.boundary_weight = jnp.float32(boundary_weight)
        self.consistency_weight = jnp.float32(consistency_weight)
        self.adaptive_weights = bool(adaptive_weights)
        if self.adaptive_weights:
            self.log_vars = jnp.zeros(3, dtype=jnp.float32)

    def __call__(self, predictions, targets):
        have_cls = ('text_type_logits' in predictions
                    and 'text_type_labels' in targets)
        have_bnd = ('boundary_predictions' in predictions
                    and 'boundary_labels' in targets
                    and predictions['boundary_predictions'].shape[1]
                    == targets['boundary_labels'].shape[1])
        have_con = ('consistency_predictions' in predictions
                    and 'consistency_labels' in targets
                    and predictions['consistency_predictions'].shape[1]
                    == targets['consistency_labels'].shape[1])

        zero = jnp.float32(0.0)
        labels = logits = bpred2d = btrue2d = cpred2d = ctrue2d = None
        n_cls = n_bnd_el = n_con_el = 0

        if have_cls:
            logits = _as_float(predictions['text_type_logits'])
            labels = jnp.asarray(targets['text_type_labels']
                                 ).reshape(-1, 1).astype(jnp.int32)
            n_cls = int(logits.shape[0])
        if have_bnd:
            bp = _as_float(predictions['boundary_predictions'])
            bt = _as_float(targets['boundary_labels'])
            n_bnd_el = int(bp.size)
            bpred2d, btrue2d = _to_lane_dense(bp), _to_lane_dense(bt)
        if have_con:
            cp = _as_float(predictions['consistency_predictions'])
            ct = _as_float(targets['consistency_labels'])
            n_con_el = int(cp.size)
            cpred2d, ctrue2d = _to_lane_dense(cp), _to_lane_dense(ct)

        if have_cls or have_bnd or have_con:
            s_cls, s_bnd, s_con = _run_fused_sums(
                labels, logits, bpred2d, btrue2d, cpred2d, ctrue2d,
                have_cls=have_cls, have_bnd=have_bnd, have_con=have_con,
                n_cls=n_cls)
        else:
            s_cls = s_bnd = s_con = zero

        cls_loss = s_cls * (1.0 / n_cls) if have_cls else zero
        bnd_loss = s_bnd * (1.0 / n_bnd_el) if have_bnd else zero
        con_loss = s_con * (1.0 / n_con_el) if have_con else zero

        losses = {'classification_loss': cls_loss,
                  'boundary_loss': bnd_loss,
                  'consistency_loss': con_loss}
        if self.adaptive_weights:
            prec = jnp.exp(-self.log_vars)
            total = (prec[0] * cls_loss + self.log_vars[0]
                     + prec[1] * bnd_loss + self.log_vars[1]
                     + prec[2] * con_loss + self.log_vars[2])
            # jnp scalars (no .item() host sync per call)
            losses['adaptive_weights'] = {'classification': prec[0],
                                          'boundary': prec[1],
                                          'consistency': prec[2]}
        else:
            total = (self.classification_weight * cls_loss
                     + self.boundary_weight * bnd_loss
                     + self.consistency_weight * con_loss)
        losses['total_loss'] = total
        return losses


if __name__ == "__main__":
    import numpy as np

    key = jax.random.PRNGKey(0)
    k1, k2, k3, k4, k5, k6 = jax.random.split(key, 6)

    B, C, S = 4, 8, 16
    logits = jax.random.normal(k1, (B, C), dtype=jnp.float32)
    labels = jax.random.randint(k2, (B,), 0, C)
    boundary_pred = jax.nn.sigmoid(jax.random.normal(k3, (B, S),
                                                     dtype=jnp.float32))
    boundary_true = (jax.random.uniform(k4, (B, S)) > 0.5).astype(jnp.float32)
    consistency_pred = jax.random.normal(k5, (B, S), dtype=jnp.float32)
    consistency_true = jax.random.normal(k6, (B, S), dtype=jnp.float32)

    preds = {'text_type_logits': logits,
             'boundary_predictions': boundary_pred,
             'consistency_predictions': consistency_pred}
    tgts = {'text_type_labels': labels,
            'boundary_labels': boundary_true,
            'consistency_labels': consistency_true}

    out_a = MultiTaskLoss(adaptive_weights=True)(preds, tgts)
    out_s = MultiTaskLoss(adaptive_weights=False)(preds, tgts)
    jax.block_until_ready(out_a['total_loss'])
    jax.block_until_ready(out_s['total_loss'])

    # pure-JAX reference check
    lse = jax.nn.logsumexp(logits, axis=-1)
    picked = jnp.take_along_axis(logits, labels[:, None], axis=-1)[:, 0]
    cls_ref = jnp.mean(lse - picked)
    p, y = boundary_pred, boundary_true
    bnd_ref = jnp.mean(-(y * jnp.maximum(jnp.log(p), -100.0)
                         + (1.0 - y) * jnp.maximum(jnp.log(1.0 - p), -100.0)))
    con_ref = jnp.mean((consistency_pred - consistency_true) ** 2)
    total_ref = cls_ref + bnd_ref + con_ref  # adaptive with log_vars == 0

    np.testing.assert_allclose(out_a['classification_loss'], cls_ref,
                               rtol=1e-4, atol=1e-5)
    np.testing.assert_allclose(out_a['boundary_loss'], bnd_ref,
                               rtol=1e-4, atol=1e-5)
    np.testing.assert_allclose(out_a['consistency_loss'], con_ref,
                               rtol=1e-4, atol=1e-5)
    np.testing.assert_allclose(out_a['total_loss'], total_ref,
                               rtol=1e-4, atol=1e-5)
    np.testing.assert_allclose(out_s['total_loss'], total_ref,
                               rtol=1e-4, atol=1e-5)
    print("KERNEL_OK")
</pallas_src>

<mosaic_0001>
module attributes {stable_mosaic.version = 11 : i64} {
  func.func @kernel(%arg0: i32, %arg1: i32, %arg2: memref<8x1xi32, #tpu.memory_space<vmem>>, %arg3: memref<8x8xf32, #tpu.memory_space<vmem>>, %arg4: memref<8x128xf32, #tpu.memory_space<vmem>>, %arg5: memref<8x128xf32, #tpu.memory_space<vmem>>, %arg6: memref<8x128xf32, #tpu.memory_space<vmem>>, %arg7: memref<8x128xf32, #tpu.memory_space<vmem>>, %arg8: memref<1x8x128xf32, #tpu.memory_space<vmem>>, %arg9: memref<8x1xf32, #tpu.memory_space<vmem>>, %arg10: memref<1x128xf32, #tpu.memory_space<vmem>>, %arg11: memref<1x128xf32, #tpu.memory_space<vmem>>) attributes {dimension_semantics = [#tpu.dimension_semantics<parallel>, #tpu.dimension_semantics<arbitrary>], iteration_bounds = array<i64: 2, 1>, scalar_prefetch = 0 : i64, scratch_operands = 3 : i64, tpu.core_type = #tpu.core_type<tc>, window_params = [{transform_indices = @transform_0, window_bounds = array<i64: 8, 1>}, {transform_indices = @transform_1, window_bounds = array<i64: 8, 8>}, {transform_indices = @transform_2, window_bounds = array<i64: 8, 128>}, {transform_indices = @transform_3, window_bounds = array<i64: 8, 128>}, {transform_indices = @transform_4, window_bounds = array<i64: 8, 128>}, {transform_indices = @transform_5, window_bounds = array<i64: 8, 128>}, {transform_indices = @transform_6, window_bounds = array<i64: 1, 8, 128>}]} {
    %c0_i32 = arith.constant 0 : i32
    %0 = arith.cmpi eq, %arg1, %c0_i32 : i32
    %1 = arith.extui %0 : i1 to i32
    %c0_i32_0 = arith.constant 0 : i32
    %2 = arith.cmpi ne, %1, %c0_i32_0 : i32
    scf.if %2 {
      %cst_37 = arith.constant 0.000000e+00 : f32
      %69 = vector.broadcast %cst_37 : f32 to vector<8x1xf32>
      %c0_38 = arith.constant 0 : index
      %c0_39 = arith.constant 0 : index
      %70 = vector.load %arg9[%c0_38, %c0_39] : memref<8x1xf32, #tpu.memory_space<vmem>>, vector<8x1xf32>
      tpu.vector_store %arg9[%c0_38, %c0_39], %69 {strides = array<i32>} : memref<8x1xf32, #tpu.memory_space<vmem>>, vector<8x1xf32>,
      %cst_40 = arith.constant 0.000000e+00 : f32
      %71 = vector.broadcast %cst_40 : f32 to vector<1x128xf32>
      %c0_41 = arith.constant 0 : index
      %c0_42 = arith.constant 0 : index
      %72 = vector.load %arg10[%c0_41, %c0_42] : memref<1x128xf32, #tpu.memory_space<vmem>>, vector<1x128xf32>
      tpu.vector_store %arg10[%c0_41, %c0_42], %71 {strides = array<i32>} : memref<1x128xf32, #tpu.memory_space<vmem>>, vector<1x128xf32>,
      %cst_43 = arith.constant 0.000000e+00 : f32
      %73 = vector.broadcast %cst_43 : f32 to vector<1x128xf32>
      %c0_44 = arith.constant 0 : index
      %c0_45 = arith.constant 0 : index
      %74 = vector.load %arg11[%c0_44, %c0_45] : memref<1x128xf32, #tpu.memory_space<vmem>>, vector<1x128xf32>
      tpu.vector_store %arg11[%c0_44, %c0_45], %73 {strides = array<i32>} : memref<1x128xf32, #tpu.memory_space<vmem>>, vector<1x128xf32>,
    } else {
    }
    %c0 = arith.constant 0 : index
    %c0_1 = arith.constant 0 : index
    %3 = vector.load %arg3[%c0, %c0_1] : memref<8x8xf32, #tpu.memory_space<vmem>>, vector<8x8xf32>
    %c0_2 = arith.constant 0 : index
    %c0_3 = arith.constant 0 : index
    %4 = vector.load %arg2[%c0_2, %c0_3] : memref<8x1xi32, #tpu.memory_space<vmem>>, vector<8x1xi32>
    %5 = tpu.iota {dimensions = array<i32: 1>} : vector<8x8xi32>
    %6 = vector.broadcast %4 : vector<8x1xi32> to vector<8x8xi32>
    %7 = arith.cmpi eq, %5, %6 : vector<8x8xi32>
    %cst = arith.constant 0.000000e+00 : f32
    %8 = vector.broadcast %cst : f32 to vector<8x8xf32>
    %9 = arith.select %7, %3, %8 : vector<8x8xi1>, vector<8x8xf32>
    %cst_4 = arith.constant dense<0.000000e+00> : vector<8xf32>
    %10 = vector.multi_reduction <add>, %9, %cst_4 [1] : vector<8x8xf32> to vector<8xf32>
    %11 = vector.shape_cast %10 : vector<8xf32> to vector<8x1xf32>
    %cst_5 = arith.constant dense<0xFF800000> : vector<8xf32>
    %12 = vector.multi_reduction <maximumf>, %3, %cst_5 [1] : vector<8x8xf32> to vector<8xf32>
    %13 = vector.shape_cast %12 : vector<8xf32> to vector<8x1xf32>
    %14 = vector.broadcast %13 : vector<8x1xf32> to vector<8x8xf32>
    %15 = arith.subf %3, %14 : vector<8x8xf32>
    %16 = math.exp %15 : vector<8x8xf32>
    %cst_6 = arith.constant dense<0.000000e+00> : vector<8xf32>
    %17 = vector.multi_reduction <add>, %16, %cst_6 [1] : vector<8x8xf32> to vector<8xf32>
    %18 = vector.shape_cast %17 : vector<8xf32> to vector<8x1xf32>
    %19 = math.log %18 : vector<8x1xf32>
    %20 = arith.addf %13, %19 : vector<8x1xf32>
    %21 = arith.subf %20, %11 : vector<8x1xf32>
    %c1_i32 = arith.constant 1 : i32
    %22 = arith.muli %arg0, %c1_i32 : i32
    %23 = arith.addi %22, %arg1 : i32
    %c8_i32 = arith.constant 8 : i32
    %24 = arith.muli %23, %c8_i32 : i32
    %25 = tpu.iota {dimensions = array<i32: 0>} : vector<8x1xi32>
    %26 = vector.broadcast %24 : i32 to vector<8x1xi32>
    %27 = arith.addi %26, %25 : vector<8x1xi32>
    %c4_i32 = arith.constant 4 : i32
    %28 = vector.broadcast %c4_i32 : i32 to vector<8x1xi32>
    %29 = arith.cmpi slt, %27, %28 : vector<8x1xi32>
    %cst_7 = arith.constant 0.000000e+00 : f32
    %30 = vector.broadcast %cst_7 : f32 to vector<8x1xf32>
    %31 = arith.select %29, %21, %30 : vector<8x1xi1>, vector<8x1xf32>
    %c0_8 = arith.constant 0 : index
    %c0_9 = arith.constant 0 : index
    %32 = vector.load %arg9[%c0_8, %c0_9] : memref<8x1xf32, #tpu.memory_space<vmem>>, vector<8x1xf32>
    %33 = arith.addf %32, %31 : vector<8x1xf32>
    %c0_10 = arith.constant 0 : index
    %c0_11 = arith.constant 0 : index
    %34 = vector.load %arg9[%c0_10, %c0_11] : memref<8x1xf32, #tpu.memory_space<vmem>>, vector<8x1xf32>
    tpu.vector_store %arg9[%c0_10, %c0_11], %33 {strides = array<i32>} : memref<8x1xf32, #tpu.memory_space<vmem>>, vector<8x1xf32>,
    %c0_12 = arith.constant 0 : index
    %c0_13 = arith.constant 0 : index
    %35 = vector.load %arg4[%c0_12, %c0_13] : memref<8x128xf32, #tpu.memory_space<vmem>>, vector<8x128xf32>
    %c0_14 = arith.constant 0 : index
    %c0_15 = arith.constant 0 : index
    %36 = vector.load %arg5[%c0_14, %c0_15] : memref<8x128xf32, #tpu.memory_space<vmem>>, vector<8x128xf32>
    %37 = math.log %35 : vector<8x128xf32>
    %cst_16 = arith.constant -1.000000e+02 : f32
    %38 = vector.broadcast %cst_16 : f32 to vector<8x128xf32>
    %39 = arith.maximumf %37, %38 : vector<8x128xf32>
    %cst_17 = arith.constant 1.000000e+00 : f32
    %40 = vector.broadcast %cst_17 : f32 to vector<8x128xf32>
    %41 = arith.subf %40, %35 : vector<8x128xf32>
    %42 = math.log %41 : vector<8x128xf32>
    %cst_18 = arith.constant -1.000000e+02 : f32
    %43 = vector.broadcast %cst_18 : f32 to vector<8x128xf32>
    %44 = arith.maximumf %42, %43 : vector<8x128xf32>
    %45 = arith.mulf %36, %39 : vector<8x128xf32>
    %cst_19 = arith.constant 1.000000e+00 : f32
    %46 = vector.broadcast %cst_19 : f32 to vector<8x128xf32>
    %47 = arith.subf %46, %36 : vector<8x128xf32>
    %48 = arith.mulf %47, %44 : vector<8x128xf32>
    %49 = arith.addf %45, %48 : vector<8x128xf32>
    %cst_20 = arith.constant 0.000000e+00 : f32
    %50 = vector.broadcast %cst_20 : f32 to vector<8x128xf32>
    %51 = arith.subf %50, %49 : vector<8x128xf32>
    %c0_21 = arith.constant 0 : index
    %c0_22 = arith.constant 0 : index
    %52 = vector.load %arg10[%c0_21, %c0_22] : memref<1x128xf32, #tpu.memory_space<vmem>>, vector<1x128xf32>
    %cst_23 = arith.constant dense<0.000000e+00> : vector<128xf32>
    %53 = vector.multi_reduction <add>, %51, %cst_23 [0] : vector<8x128xf32> to vector<128xf32>
    %54 = vector.shape_cast %53 : vector<128xf32> to vector<1x128xf32>
    %55 = arith.addf %52, %54 : vector<1x128xf32>
    %c0_24 = arith.constant 0 : index
    %c0_25 = arith.constant 0 : index
    %56 = vector.load %arg10[%c0_24, %c0_25] : memref<1x128xf32, #tpu.memory_space<vmem>>, vector<1x128xf32>
    tpu.vector_store %arg10[%c0_24, %c0_25], %55 {strides = array<i32>} : memref<1x128xf32, #tpu.memory_space<vmem>>, vector<1x128xf32>,
    %c0_26 = arith.constant 0 : index
    %c0_27 = arith.constant 0 : index
    %57 = vector.load %arg6[%c0_26, %c0_27] : memref<8x128xf32, #tpu.memory_space<vmem>>, vector<8x128xf32>
    %c0_28 = arith.constant 0 : index
    %c0_29 = arith.constant 0 : index
    %58 = vector.load %arg7[%c0_28, %c0_29] : memref<8x128xf32, #tpu.memory_space<vmem>>, vector<8x128xf32>
    %59 = arith.subf %57, %58 : vector<8x128xf32>
    %c0_30 = arith.constant 0 : index
    %c0_31 = arith.constant 0 : index
    %60 = vector.load %arg11[%c0_30, %c0_31] : memref<1x128xf32, #tpu.memory_space<vmem>>, vector<1x128xf32>
    %61 = arith.mulf %59, %59 : vector<8x128xf32>
    %cst_32 = arith.constant dense<0.000000e+00> : vector<128xf32>
    %62 = vector.multi_reduction <add>, %61, %cst_32 [0] : vector<8x128xf32> to vector<128xf32>
    %63 = vector.shape_cast %62 : vector<128xf32> to vector<1x128xf32>
    %64 = arith.addf %60, %63 : vector<1x128xf32>
    %c0_33 = arith.constant 0 : index
    %c0_34 = arith.constant 0 : index
    %65 = vector.load %arg11[%c0_33, %c0_34] : memref<1x128xf32, #tpu.memory_space<vmem>>, vector<1x128xf32>
    tpu.vector_store %arg11[%c0_33, %c0_34], %64 {strides = array<i32>} : memref<1x128xf32, #tpu.memory_space<vmem>>, vector<1x128xf32>,
    %c0_i32_35 = arith.constant 0 : i32
    %66 = arith.cmpi eq, %arg1, %c0_i32_35 : i32
    %67 = arith.extui %66 : i1 to i32
    %c0_i32_36 = arith.constant 0 : i32
    %68 = arith.cmpi ne, %67, %c0_i32_36 : i32
    scf.if %68 {
      %69 = tpu.iota {dimensions = array<i32: 1>} : vector<8x128xi32>
      %70 = tpu.iota {dimensions = array<i32: 0>} : vector<8x128xi32>
      %cst_37 = arith.constant 0.000000e+00 : f32
      %71 = vector.broadcast %cst_37 : f32 to vector<8x128xf32>
      %c0_i32_38 = arith.constant 0 : i32
      %72 = vector.broadcast %c0_i32_38 : i32 to vector<8x128xi32>
      %73 = arith.cmpi eq, %70, %72 : vector<8x128xi32>
      %c0_i32_39 = arith.constant 0 : i32
      %74 = vector.broadcast %c0_i32_39 : i32 to vector<8x128xi32>
      %75 = arith.cmpi eq, %69, %74 : vector<8x128xi32>
      %76 = arith.andi %73, %75 : vector<8x128xi1>
      %c0_40 = arith.constant 0 : index
      %c0_41 = arith.constant 0 : index
      %77 = vector.load %arg9[%c0_40, %c0_41] : memref<8x1xf32, #tpu.memory_space<vmem>>, vector<8x1xf32>
      %78 = vector.shape_cast %77 : vector<8x1xf32> to vector<1x8x1xf32>
      %cst_42 = arith.constant dense<0.000000e+00> : vector<1xf32>
      %79 = vector.multi_reduction <add>, %78, %cst_42 [1, 2] : vector<1x8x1xf32> to vector<1xf32>
      %80 = vector.shape_cast %79 : vector<1xf32> to vector<1x1x1xf32>
      %81 = vector.extract %80[0, 0, 0] : f32 from vector<1x1x1xf32>
      %82 = vector.broadcast %81 : f32 to vector<8x128xf32>
      %83 = arith.select %76, %82, %71 : vector<8x128xi1>, vector<8x128xf32>
      %c0_i32_43 = arith.constant 0 : i32
      %84 = vector.broadcast %c0_i32_43 : i32 to vector<8x128xi32>
      %85 = arith.cmpi eq, %70, %84 : vector<8x128xi32>
      %c1_i32_44 = arith.constant 1 : i32
      %86 = vector.broadcast %c1_i32_44 : i32 to vector<8x128xi32>
      %87 = arith.cmpi eq, %69, %86 : vector<8x128xi32>
      %88 = arith.andi %85, %87 : vector<8x128xi1>
      %c0_45 = arith.constant 0 : index
      %c0_46 = arith.constant 0 : index
      %89 = vector.load %arg10[%c0_45, %c0_46] : memref<1x128xf32, #tpu.memory_space<vmem>>, vector<1x128xf32>
      %90 = vector.shape_cast %89 : vector<1x128xf32> to vector<1x1x128xf32>
      %cst_47 = arith.constant dense<0.000000e+00> : vector<1xf32>
      %91 = vector.multi_reduction <add>, %90, %cst_47 [1, 2] : vector<1x1x128xf32> to vector<1xf32>
      %92 = vector.shape_cast %91 : vector<1xf32> to vector<1x1x1xf32>
      %93 = vector.extract %92[0, 0, 0] : f32 from vector<1x1x1xf32>
      %94 = vector.broadcast %93 : f32 to vector<8x128xf32>
      %95 = arith.select %88, %94, %83 : vector<8x128xi1>, vector<8x128xf32>
      %c0_i32_48 = arith.constant 0 : i32
      %96 = vector.broadcast %c0_i32_48 : i32 to vector<8x128xi32>
      %97 = arith.cmpi eq, %70, %96 : vector<8x128xi32>
      %c2_i32 = arith.constant 2 : i32
      %98 = vector.broadcast %c2_i32 : i32 to vector<8x128xi32>
      %99 = arith.cmpi eq, %69, %98 : vector<8x128xi32>
      %100 = arith.andi %97, %99 : vector<8x128xi1>
      %c0_49 = arith.constant 0 : index
      %c0_50 = arith.constant 0 : index
      %101 = vector.load %arg11[%c0_49, %c0_50] : memref<1x128xf32, #tpu.memory_space<vmem>>, vector<1x128xf32>
      %102 = vector.shape_cast %101 : vector<1x128xf32> to vector<1x1x128xf32>
      %cst_51 = arith.constant dense<0.000000e+00> : vector<1xf32>
      %103 = vector.multi_reduction <add>, %102, %cst_51 [1, 2] : vector<1x1x128xf32> to vector<1xf32>
      %104 = vector.shape_cast %103 : vector<1xf32> to vector<1x1x1xf32>
      %105 = vector.extract %104[0, 0, 0] : f32 from vector<1x1x1xf32>
      %106 = vector.broadcast %105 : f32 to vector<8x128xf32>
      %107 = arith.select %100, %106, %95 : vector<8x128xi1>, vector<8x128xf32>
      %c0_52 = arith.constant 0 : index
      %c0_53 = arith.constant 0 : index
      %c0_54 = arith.constant 0 : index
      %108 = vector.load %arg8[%c0_52, %c0_53, %c0_54] : memref<1x8x128xf32, #tpu.memory_space<vmem>>, vector<1x8x128xf32>
      %109 = vector.shape_cast %108 : vector<1x8x128xf32> to vector<8x128xf32>
      %110 = vector.shape_cast %107 : vector<8x128xf32> to vector<1x8x128xf32>
      tpu.vector_store %arg8[%c0_52, %c0_53, %c0_54], %110 {strides = array<i32>} : memref<1x8x128xf32, #tpu.memory_space<vmem>>, vector<1x8x128xf32>,
    } else {
    }
    return
  }
  func.func @transform_0(%arg0: i32, %arg1: i32) -> (i32, i32) {
    %c1_i32 = arith.constant 1 : i32
    %0 = arith.muli %arg0, %c1_i32 : i32
    %1 = arith.addi %0, %arg1 : i32
    %c0_i32 = arith.constant 0 : i32
    %c0_i32_0 = arith.constant 0 : i32
    return %1, %c0_i32 : i32, i32
  }
  func.func @transform_1(%arg0: i32, %arg1: i32) -> (i32, i32) {
    %c1_i32 = arith.constant 1 : i32
    %0 = arith.muli %arg0, %c1_i32 : i32
    %1 = arith.addi %0, %arg1 : i32
    %c0_i32 = arith.constant 0 : i32
    %c0_i32_0 = arith.constant 0 : i32
    return %1, %c0_i32 : i32, i32
  }
  func.func @transform_2(%arg0: i32, %arg1: i32) -> (i32, i32) {
    %c1_i32 = arith.constant 1 : i32
    %0 = arith.muli %arg0, %c1_i32 : i32
    %1 = arith.addi %0, %arg1 : i32
    %c0_i32 = arith.constant 0 : i32
    %c0_i32_0 = arith.constant 0 : i32
    return %1, %c0_i32 : i32, i32
  }
  func.func @transform_3(%arg0: i32, %arg1: i32) -> (i32, i32) {
    %c1_i32 = arith.constant 1 : i32
    %0 = arith.muli %arg0, %c1_i32 : i32
    %1 = arith.addi %0, %arg1 : i32
    %c0_i32 = arith.constant 0 : i32
    %c0_i32_0 = arith.constant 0 : i32
    return %1, %c0_i32 : i32, i32
  }
  func.func @transform_4(%arg0: i32, %arg1: i32) -> (i32, i32) {
    %c1_i32 = arith.constant 1 : i32
    %0 = arith.muli %arg0, %c1_i32 : i32
    %1 = arith.addi %0, %arg1 : i32
    %c0_i32 = arith.constant 0 : i32
    %c0_i32_0 = arith.constant 0 : i32
    return %1, %c0_i32 : i32, i32
  }
  func.func @transform_5(%arg0: i32, %arg1: i32) -> (i32, i32) {
    %c1_i32 = arith.constant 1 : i32
    %0 = arith.muli %arg0, %c1_i32 : i32
    %1 = arith.addi %0, %arg1 : i32
    %c0_i32 = arith.constant 0 : i32
    %c0_i32_0 = arith.constant 0 : i32
    return %1, %c0_i32 : i32, i32
  }
  func.func @transform_6(%arg0: i32, %arg1: i32) -> (i32, i32, i32) {
    %c0_i32 = arith.constant 0 : i32
    %c0_i32_0 = arith.constant 0 : i32
    %c0_i32_1 = arith.constant 0 : i32
    return %arg0, %c0_i32, %c0_i32_0 : i32, i32, i32
  }
}

</mosaic_0001>

<llo_original>
// kernel: tpu_custom_call.1
$region0: #{tpu_custom_call.1}
  #allocation0 [shape = 'u32[]', space=smem, size = 0x4, offset = 0x4, fixed_abs, tag = 'smem constant byte address 0x4 - core index']
  #allocation1 [shape = 'u32[144,128]{1,0:T(1,128)}', space=vmem, size = 0x12000, scoped, tag = 'internal scratch']
  #allocation2 [shape = 'f32[8,1]{1,0:T(8,128)}', space=vmem, size = 0x1000, scoped, tag = 'scratch operand']
  #allocation3 [shape = 'f32[1,128]{1,0:T(1,128)}', space=vmem, size = 0x200, scoped, tag = 'scratch operand']
  #allocation4 [shape = 'f32[1,128]{1,0:T(1,128)}', space=vmem, size = 0x200, scoped, tag = 'scratch operand']
  %s0 = inlined_call_operand.vmem [shape: s32[16,1], index: 0, kind: input, shape index: {}]
  %s1 = inlined_call_operand.vmem [shape: f32[16,8], index: 1, kind: input, shape index: {}]
  %s2 = inlined_call_operand.vmem [shape: f32[16,128], index: 2, kind: input, shape index: {}]
  %s3 = inlined_call_operand.vmem [shape: f32[16,128], index: 3, kind: input, shape index: {}]
  %s4 = inlined_call_operand.vmem [shape: f32[16,128], index: 4, kind: input, shape index: {}]
  %s5 = inlined_call_operand.hbm [shape: f32[16,128], index: 5, kind: input, shape index: {}]
  %s6 = inlined_call_operand.hbm [shape: f32[2,8,128], index: 6, kind: output, shape index: {}]
  %s7 = sld [smem:[#allocation0]]
  $region69: #{tpu_custom_call.1} parent=0
    _
  %s9 = ssub.s32 1, %s7
  %s10 = scalar_select 0, %s9, %s7
  $region1: #{tpu_custom_call.1} parent=0
    #allocation5 [shape = 'u8[8192]{0}', space=vmem, size = 0x2000, scoped, tag = 'input window, operand 5']
    #allocation6 [shape = 's32[2]{0}', space=sflag, size = 0x8, scoped, tag = 'scoped memory for tpu_custom_call.1']
    #allocation7 [shape = 's32[2]{0}', space=sflag, size = 0x8, scoped, tag = 'scoped memory for tpu_custom_call.1']
    #allocation8 [shape = 'u8[8192]{0}', space=vmem, size = 0x2000, scoped, tag = 'output window, operand 0']
    %11 = vsyncpa [#allocation6], 0
    %s12 = scalar_lea.sflag [#allocation6], 1
    %13 = vsyncpa %s12, 0
    %14 = vsyncpa [#allocation7], 0
    %s15 = scalar_lea.sflag [#allocation7], 1
    %16 = vsyncpa %s15, 0
    loop: start=0, step=1, limit=4
    $region2: #{tpu_custom_call.1} parent=1 // loop_pre_header
      _
    $region3: #{tpu_custom_call.1} parent=1 // loop_header
      %s18 = sphi 0, %s22
      %p19 = scmp.ge.s32.totalorder %s18, 4
      %s25 = sphi 0, %s37
      %s26 = sphi 0, %s33
      %s27 = sphi 0, %s25
      %s28 = sphi 0, %s26
      %s29 = sphi 0, %s27
      %s30 = sphi 0, %s28
      %s42 = sphi 0, %s44
      %s45 = sphi 0, %s42
      %s46 = sphi 0, %s45
      %s62 = sphi 0, %s46
      %s70 = sphi 0, %s72
      %s73 = sphi 0, %s70
      %s74 = sphi 0, %s73
      %s90 = sphi 0, %s74
      %s98 = sphi 0, %s100
      %s101 = sphi 0, %s98
      %s102 = sphi 0, %s101
      %s118 = sphi 0, %s102
      %s126 = sphi 0, %s128
      %s129 = sphi 0, %s126
      %s130 = sphi 0, %s129
      %s146 = sphi 0, %s130
      %s154 = sphi 0, %s156
      %s157 = sphi 0, %s154
      %s158 = sphi 0, %s157
      %s174 = sphi 0, %s158
      %s182 = sphi 0, %s184
      %s185 = sphi 0, %s182
      %s186 = sphi 0, %s185
      %s202 = sphi 0, %s186
      %s208 = sphi 0, %s210
      %s211 = sphi 0, %s208
      %s212 = sphi 0, %s211
      %s228 = sphi 0, %s212
    $region4: #{tpu_custom_call.1} parent=1 // loop_header_branch
      %21 = sbr.rel (%p19) target = $region8
    $region5: #{tpu_custom_call.1} parent=1 // loop_body
      %s23 = ssub.s32 %s18, 1
      %s24 = ssub.s32 %s18, 2
      %s31 = sadd.s32 1, %s26
      %p32 = scmp.ge.s32.totalorder %s31, 1
      %s33 = scalar_select %p32, 0, %s31
      %s34 = sadd.s32 1, %s25
      %s35 = scalar_select %p32, %s34, %s25
      %p36 = scmp.ge.s32.totalorder %s35, 2
      %s37 = scalar_select %p36, 0, %s35
      %s38 = sadd.s32 %s25, %s26
      %s39 = sadd.s32 %s37, %s33
      %s40 = ssub.s32 %s38, %s39
      %p41 = scmp.eq.s32.totalorder %s40, 0
      %s43 = sadd.s32 %s42, 1
      %s44 = scalar_select %p41, %s42, %s43
      %p47 = pneg %p41
      %p48 = scmp.eq.s32.totalorder %s18, 1
      %p49 = por %p47, %p48
      %p50 = scmp.ne.s32.totalorder %s42, %s45
      %p51 = scmp.eq.s32.totalorder %s18, 0
      %p52 = por %p50, %p51
      %p53 = scmp.ne.s32.totalorder %s42, %s45
      %p54 = scmp.eq.s32.totalorder %s23, 1
      %p55 = por %p53, %p54
      %p56 = scmp.ne.s32.totalorder %s45, %s46
      %p57 = scmp.eq.s32.totalorder %s23, 0
      %p58 = por %p56, %p57
      %p59 = scmp.ne.s32.totalorder %s45, %s46
      %p60 = scmp.eq.s32.totalorder %s24, 1
      %p61 = por %p59, %p60
      %p63 = scmp.ne.s32.totalorder %s46, %s62
      %p64 = scmp.eq.s32.totalorder %s24, 0
      %p65 = por %p63, %p64
      %s66 = sadd.s32 %s25, %s26
      %s67 = sadd.s32 %s37, %s33
      %s68 = ssub.s32 %s66, %s67
      %p69 = scmp.eq.s32.totalorder %s68, 0
      %s71 = sadd.s32 %s70, 1
      %s72 = scalar_select %p69, %s70, %s71
      %p75 = pneg %p69
      %p76 = scmp.eq.s32.totalorder %s18, 1
      %p77 = por %p75, %p76
      %p78 = scmp.ne.s32.totalorder %s70, %s73
      %p79 = scmp.eq.s32.totalorder %s18, 0
      %p80 = por %p78, %p79
      %p81 = scmp.ne.s32.totalorder %s70, %s73
      %p82 = scmp.eq.s32.totalorder %s23, 1
      %p83 = por %p81, %p82
      %p84 = scmp.ne.s32.totalorder %s73, %s74
      %p85 = scmp.eq.s32.totalorder %s23, 0
      %p86 = por %p84, %p85
      %p87 = scmp.ne.s32.totalorder %s73, %s74
      %p88 = scmp.eq.s32.totalorder %s24, 1
      %p89 = por %p87, %p88
      %p91 = scmp.ne.s32.totalorder %s74, %s90
      %p92 = scmp.eq.s32.totalorder %s24, 0
      %p93 = por %p91, %p92
      %s94 = sadd.s32 %s25, %s26
      %s95 = sadd.s32 %s37, %s33
      %s96 = ssub.s32 %s94, %s95
      %p97 = scmp.eq.s32.totalorder %s96, 0
      %s99 = sadd.s32 %s98, 1
      %s100 = scalar_select %p97, %s98, %s99
      %p103 = pneg %p97
      %p104 = scmp.eq.s32.totalorder %s18, 1
      %p105 = por %p103, %p104
      %p106 = scmp.ne.s32.totalorder %s98, %s101
      %p107 = scmp.eq.s32.totalorder %s18, 0
      %p108 = por %p106, %p107
      %p109 = scmp.ne.s32.totalorder %s98, %s101
      %p110 = scmp.eq.s32.totalorder %s23, 1
      %p111 = por %p109, %p110
      %p112 = scmp.ne.s32.totalorder %s101, %s102
      %p113 = scmp.eq.s32.totalorder %s23, 0
      %p114 = por %p112, %p113
      %p115 = scmp.ne.s32.totalorder %s101, %s102
      %p116 = scmp.eq.s32.totalorder %s24, 1
      %p117 = por %p115, %p116
      %p119 = scmp.ne.s32.totalorder %s102, %s118
      %p120 = scmp.eq.s32.totalorder %s24, 0
      %p121 = por %p119, %p120
      %s122 = sadd.s32 %s25, %s26
      %s123 = sadd.s32 %s37, %s33
      %s124 = ssub.s32 %s122, %s123
      %p125 = scmp.eq.s32.totalorder %s124, 0
      %s127 = sadd.s32 %s126, 1
      %s128 = scalar_select %p125, %s126, %s127
      %p131 = pneg %p125
      %p132 = scmp.eq.s32.totalorder %s18, 1
      %p133 = por %p131, %p132
      %p134 = scmp.ne.s32.totalorder %s126, %s129
      %p135 = scmp.eq.s32.totalorder %s18, 0
      %p136 = por %p134, %p135
      %p137 = scmp.ne.s32.totalorder %s126, %s129
      %p138 = scmp.eq.s32.totalorder %s23, 1
      %p139 = por %p137, %p138
      %p140 = scmp.ne.s32.totalorder %s129, %s130
      %p141 = scmp.eq.s32.totalorder %s23, 0
      %p142 = por %p140, %p141
      %p143 = scmp.ne.s32.totalorder %s129, %s130
      %p144 = scmp.eq.s32.totalorder %s24, 1
      %p145 = por %p143, %p144
      %p147 = scmp.ne.s32.totalorder %s130, %s146
      %p148 = scmp.eq.s32.totalorder %s24, 0
      %p149 = por %p147, %p148
      %s150 = sadd.s32 %s25, %s26
      %s151 = sadd.s32 %s37, %s33
      %s152 = ssub.s32 %s150, %s151
      %p153 = scmp.eq.s32.totalorder %s152, 0
      %s155 = sadd.s32 %s154, 1
      %s156 = scalar_select %p153, %s154, %s155
      %p159 = pneg %p153
      %p160 = scmp.eq.s32.totalorder %s18, 1
      %p161 = por %p159, %p160
      %p162 = scmp.ne.s32.totalorder %s154, %s157
      %p163 = scmp.eq.s32.totalorder %s18, 0
      %p164 = por %p162, %p163
      %p165 = scmp.ne.s32.totalorder %s154, %s157
      %p166 = scmp.eq.s32.totalorder %s23, 1
      %p167 = por %p165, %p166
      %p168 = scmp.ne.s32.totalorder %s157, %s158
      %p169 = scmp.eq.s32.totalorder %s23, 0
      %p170 = por %p168, %p169
      %p171 = scmp.ne.s32.totalorder %s157, %s158
      %p172 = scmp.eq.s32.totalorder %s24, 1
      %p173 = por %p171, %p172
      %p175 = scmp.ne.s32.totalorder %s158, %s174
      %p176 = scmp.eq.s32.totalorder %s24, 0
      %p177 = por %p175, %p176
      %s178 = sadd.s32 %s25, %s26
      %s179 = sadd.s32 %s37, %s33
      %s180 = ssub.s32 %s178, %s179
      %p181 = scmp.eq.s32.totalorder %s180, 0
      %s183 = sadd.s32 %s182, 1
      %s184 = scalar_select %p181, %s182, %s183
      %p187 = pneg %p181
      %p188 = scmp.eq.s32.totalorder %s18, 1
      %p189 = por %p187, %p188
      %p190 = scmp.ne.s32.totalorder %s182, %s185
      %p191 = scmp.eq.s32.totalorder %s18, 0
      %p192 = por %p190, %p191
      %p193 = scmp.ne.s32.totalorder %s182, %s185
      %p194 = scmp.eq.s32.totalorder %s23, 1
      %p195 = por %p193, %p194
      %p196 = scmp.ne.s32.totalorder %s185, %s186
      %p197 = scmp.eq.s32.totalorder %s23, 0
      %p198 = por %p196, %p197
      %p199 = scmp.ne.s32.totalorder %s185, %s186
      %p200 = scmp.eq.s32.totalorder %s24, 1
      %p201 = por %p199, %p200
      %p203 = scmp.ne.s32.totalorder %s186, %s202
      %p204 = scmp.eq.s32.totalorder %s24, 0
      %p205 = por %p203, %p204
      %s206 = ssub.s32 %s25, %s37
      %p207 = scmp.eq.s32.totalorder %s206, 0
      %s209 = sadd.s32 %s208, 1
      %s210 = scalar_select %p207, %s208, %s209
      %p213 = pneg %p207
      %p214 = scmp.eq.s32.totalorder %s18, 1
      %p215 = por %p213, %p214
      %p216 = scmp.ne.s32.totalorder %s208, %s211
      %p217 = scmp.eq.s32.totalorder %s18, 0
      %p218 = por %p216, %p217
      %p219 = scmp.ne.s32.totalorder %s208, %s211
      %p220 = scmp.eq.s32.totalorder %s23, 1
      %p221 = por %p219, %p220
      %p222 = scmp.ne.s32.totalorder %s211, %s212
      %p223 = scmp.eq.s32.totalorder %s23, 0
      %p224 = por %p222, %p223
      %p225 = scmp.ne.s32.totalorder %s211, %s212
      %p226 = scmp.eq.s32.totalorder %s24, 1
      %p227 = por %p225, %p226
      %p229 = scmp.ne.s32.totalorder %s212, %s228
      %p230 = scmp.eq.s32.totalorder %s24, 0
      %p231 = por %p229, %p230
      %p232 = scmp.le.s32.totalorder 1, %s18
      %p233 = scmp.lt.s32.totalorder %s18, 3
      %p234 = pnand %p232, %p233
      %p235 = pneg %p234
      // Predicated region
      $region9: #{tpu_custom_call.1} parent=5 // pred_check
        _
      $region10: #{tpu_custom_call.1} parent=5 // pred_check_branch
        %237 = sbr.rel (%p234) target = $region12
      $region11: #{tpu_custom_call.1} parent=5 // pred_region
        %s238 = ssub.s32 %s18, 1
      $region12: #{tpu_custom_call.1} parent=5 // pred_fallthru
        _
      %p239 = scmp.lt.s32.totalorder %s18, 2
      // Predicated region
      $region13: #{tpu_custom_call.1} parent=5 // pred_check
        %p240 = pneg %p239
      $region14: #{tpu_custom_call.1} parent=5 // pred_check_branch
        %242 = sbr.rel (%p240) target = $region16
      $region15: #{tpu_custom_call.1} parent=5 // pred_region
        // Predicated region
        $region17: #{tpu_custom_call.1} parent=15 // pred_check
          %p243 = pneg %p52
        $region18: #{tpu_custom_call.1} parent=15 // pred_check_branch
          %245 = sbr.rel (%p243) target = $region20
        $region19: #{tpu_custom_call.1} parent=15 // pred_region
          %s246 = sadd.s32 %s25, %s26
          %p247 = scmp.lt.s32.totalorder %s246, 1
          %s248 = scalar_select %p247, %s246, 1
          %s249 = smul.addr %s248, 8
          %s250 = scalar_lea.vmem %s0, %s249
          %s251 = sadd.s32 %s25, %s26
        $region20: #{tpu_custom_call.1} parent=15 // pred_fallthru
          _
        // Predicated region
        $region21: #{tpu_custom_call.1} parent=15 // pred_check
          %p252 = pneg %p80
        $region22: #{tpu_custom_call.1} parent=15 // pred_check_branch
          %254 = sbr.rel (%p252) target = $region24
        $region23: #{tpu_custom_call.1} parent=15 // pred_region
          %s255 = sadd.s32 %s25, %s26
          %p256 = scmp.lt.s32.totalorder %s255, 1
          %s257 = scalar_select %p256, %s255, 1
          %s258 = smul.addr %s257, 8
          %s259 = scalar_lea.vmem %s1, %s258
          %s260 = sadd.s32 %s25, %s26
        $region24: #{tpu_custom_call.1} parent=15 // pred_fallthru
          _
        // Predicated region
        $region25: #{tpu_custom_call.1} parent=15 // pred_check
          %p261 = pneg %p108
        $region26: #{tpu_custom_call.1} parent=15 // pred_check_branch
          %263 = sbr.rel (%p261) target = $region28
        $region27: #{tpu_custom_call.1} parent=15 // pred_region
          %s264 = sadd.s32 %s25, %s26
          %p265 = scmp.lt.s32.totalorder %s264, 1
          %s266 = scalar_select %p265, %s264, 1
          %s267 = smul.addr %s266, 8
          %s268 = scalar_lea.vmem %s2, %s267
          %s269 = sadd.s32 %s25, %s26
        $region28: #{tpu_custom_call.1} parent=15 // pred_fallthru
          _
        // Predicated region
        $region29: #{tpu_custom_call.1} parent=15 // pred_check
          %p270 = pneg %p136
        $region30: #{tpu_custom_call.1} parent=15 // pred_check_branch
          %272 = sbr.rel (%p270) target = $region32
        $region31: #{tpu_custom_call.1} parent=15 // pred_region
          %s273 = sadd.s32 %s25, %s26
          %p274 = scmp.lt.s32.totalorder %s273, 1
          %s275 = scalar_select %p274, %s273, 1
          %s276 = smul.addr %s275, 8
          %s277 = scalar_lea.vmem %s3, %s276
          %s278 = sadd.s32 %s25, %s26
        $region32: #{tpu_custom_call.1} parent=15 // pred_fallthru
          _
        // Predicated region
        $region33: #{tpu_custom_call.1} parent=15 // pred_check
          %p279 = pneg %p164
        $region34: #{tpu_custom_call.1} parent=15 // pred_check_branch
          %281 = sbr.rel (%p279) target = $region36
        $region35: #{tpu_custom_call.1} parent=15 // pred_region
          %s282 = sadd.s32 %s25, %s26
          %p283 = scmp.lt.s32.totalorder %s282, 1
          %s284 = scalar_select %p283, %s282, 1
          %s285 = smul.addr %s284, 8
          %s286 = scalar_lea.vmem %s4, %s285
          %s287 = sadd.s32 %s25, %s26
        $region36: #{tpu_custom_call.1} parent=15 // pred_fallthru
          _
        // Predicated region
        $region37: #{tpu_custom_call.1} parent=15 // pred_check
          %p288 = pneg %p192
        $region38: #{tpu_custom_call.1} parent=15 // pred_check_branch
          %290 = sbr.rel (%p288) target = $region40
        $region39: #{tpu_custom_call.1} parent=15 // pred_region
          %s291 = sand.u32 %s182, 1
          %s292 = scalar_lea.sflag [#allocation6], %s291
          %s293 = sand.u32 %s182, 1
          %s294 = smul.addr %s293, 8
          %s295 = scalar_lea.vmem [#allocation5], %s294
          %s296 = sadd.s32 %s25, %s26
          %s298 = ssub.s32 128, 128
          %299 = vsyncadd %s292, %s298
          %s300 = smul.addr %s296, 128
          %s301 = scalar_lea.hbm %s5, %s300
          %s303 = sshll.u32 %s295, 4
          %s304 = int_to_ptr.vmem [resolvable:$true] %s303
          %306 = dma.hbm_to_vmem [thread:$0]  %s301, 128, %s304, %s292
        $region40: #{tpu_custom_call.1} parent=15 // pred_fallthru
          _
      $region16: #{tpu_custom_call.1} parent=5 // pred_fallthru
        _
      %p307 = scmp.le.s32.totalorder 1, %s18
      %p308 = scmp.lt.s32.totalorder %s18, 3
      %p309 = pnand %p307, %p308
      %p310 = pneg %p309
      // Predicated region
      $region41: #{tpu_custom_call.1} parent=5 // pred_check
        _
      $region42: #{tpu_custom_call.1} parent=5 // pred_check_branch
        %312 = sbr.rel (%p309) target = $region44
      $region43: #{tpu_custom_call.1} parent=5 // pred_region
        %s313 = ssub.s32 %s18, 1
        %s314 = sand.u32 %s185, 1
        %s315 = scalar_lea.sflag [#allocation6], %s314
        %s316 = sand.u32 %s185, 1
        %s317 = smul.addr %s316, 8
        %s318 = scalar_lea.vmem [#allocation5], %s317
        // Predicated region
        $region45: #{tpu_custom_call.1} parent=43 // pred_check
          %p319 = pneg %p198
        $region46: #{tpu_custom_call.1} parent=43 // pred_check_branch
          %321 = sbr.rel (%p319) target = $region48
        $region47: #{tpu_custom_call.1} parent=43 // pred_region
          %322 = dma.done %s315, 128
        $region48: #{tpu_custom_call.1} parent=43 // pred_fallthru
          _
        %s323 = sadd.s32 %s27, %s28
        %p324 = scmp.lt.s32.totalorder %s323, 1
        %s325 = scalar_select %p324, %s323, 1
        %s326 = smul.addr %s325, 8
        %s327 = scalar_lea.vmem %s0, %s326
        %p328 = pneg %p58
        %p329 = pneg %p55
        %s330 = sadd.s32 %s27, %s28
        %p331 = scmp.lt.s32.totalorder %s330, 1
        %s332 = scalar_select %p331, %s330, 1
        %s333 = smul.addr %s332, 8
        %s334 = scalar_lea.vmem %s1, %s333
        %p335 = pneg %p86
        %p336 = pneg %p83
        %s337 = sadd.s32 %s27, %s28
        %p338 = scmp.lt.s32.totalorder %s337, 1
        %s339 = scalar_select %p338, %s337, 1
        %s340 = smul.addr %s339, 8
        %s341 = scalar_lea.vmem %s2, %s340
        %p342 = pneg %p114
        %p343 = pneg %p111
        %s344 = sadd.s32 %s27, %s28
        %p345 = scmp.lt.s32.totalorder %s344, 1
        %s346 = scalar_select %p345, %s344, 1
        %s347 = smul.addr %s346, 8
        %s348 = scalar_lea.vmem %s3, %s347
        %p349 = pneg %p142
        %p350 = pneg %p139
        %s351 = sadd.s32 %s27, %s28
        %p352 = scmp.lt.s32.totalorder %s351, 1
        %s353 = scalar_select %p352, %s351, 1
        %s354 = smul.addr %s353, 8
        %s355 = scalar_lea.vmem %s4, %s354
        %p356 = pneg %p170
        %p357 = pneg %p167
        %s358 = sand.u32 %s185, 1
        %s359 = scalar_lea.sflag [#allocation6], %s358
        %s360 = sand.u32 %s185, 1
        %s361 = smul.addr %s360, 8
        %s362 = scalar_lea.vmem [#allocation5], %s361
        %p363 = pneg %p198
        %p364 = pneg %p195
        %p365 = pneg %p224
        %p366 = pneg %p221
        %s367 = sand.u32 %s211, 1
        %s368 = scalar_lea.sflag [#allocation7], %s367
        %s369 = sand.u32 %s211, 1
        %s370 = smul.addr %s369, 8
        %s371 = scalar_lea.vmem [#allocation8], %s370
        %s372 = sadd.s32 %s27, %s28
        %p373 = scmp.lt.s32.totalorder %s372, 1
        %s374 = scalar_select %p373, %s372, 1
        %s375 = smul.addr %s374, 8
        %s376 = scalar_lea.vmem %s0, %s375
        %s377 = sadd.s32 %s27, %s28
        %s378 = sadd.s32 %s27, %s28
        %p379 = scmp.lt.s32.totalorder %s378, 1
        %s380 = scalar_select %p379, %s378, 1
        %s381 = smul.addr %s380, 8
        %s382 = scalar_lea.vmem %s1, %s381
        %s383 = sadd.s32 %s27, %s28
        %s384 = sadd.s32 %s27, %s28
        %p385 = scmp.lt.s32.totalorder %s384, 1
        %s386 = scalar_select %p385, %s384, 1
        %s387 = smul.addr %s386, 8
        %s388 = scalar_lea.vmem %s2, %s387
        %s389 = sadd.s32 %s27, %s28
        %s390 = sadd.s32 %s27, %s28
        %p391 = scmp.lt.s32.totalorder %s390, 1
        %s392 = scalar_select %p391, %s390, 1
        %s393 = smul.addr %s392, 8
        %s394 = scalar_lea.vmem %s3, %s393
        %s395 = sadd.s32 %s27, %s28
        %s396 = sadd.s32 %s27, %s28
        %p397 = scmp.lt.s32.totalorder %s396, 1
        %s398 = scalar_select %p397, %s396, 1
        %s399 = smul.addr %s398, 8
        %s400 = scalar_lea.vmem %s4, %s399
        %s401 = sadd.s32 %s27, %s28
        %s402 = sadd.s32 %s27, %s28
        %p403 = scmp.eq.s32.totalorder %s28, 0
        // Predicated region
        $region49: #{tpu_custom_call.1} parent=43 // pred_check
          %p404 = pneg %p403
        $region50: #{tpu_custom_call.1} parent=43 // pred_check_branch
          %406 = sbr.rel (%p404) target = $region52
        $region51: #{tpu_custom_call.1} parent=43 // pred_region
          %vm407 = vcmask 7168
          %408 = vst.msk [vmem:[#allocation2] sm:$0xff] %vm407, 0.0
          %409 = vst [vmem:[#allocation3] sm:$0x1] 0.0
          %410 = vst [vmem:[#allocation4] sm:$0x1] 0.0
        $region52: #{tpu_custom_call.1} parent=43 // pred_fallthru
          _
        %v411 = vld [vmem:[%s382] sm:$0xff]
        %v412 = vld [vmem:[%s376] sm:$0xff]
        %v413 = vlaneseq
        %v414 = vand.u32 %v413, 127
        %415 = vset.pattern.permute.xlu0 0
        %416 = vperm.xlu0 %415, %v412
        %v417 = vpop.permute.xlu0 %416
        %vm418 = vcmp.eq.s32.totalorder %v414, %v417
        %v419 = vsel %vm418, %v411, 0.0
        %vm420 = vcmask 64512
        %v421 = vsel %vm420, %v419, 0.0
        %422 = vadd.xlane.f32.xlu0 %v421
        %v423 = vpop.xlane.xlu0 %422
        %v424 = vsel %vm420, %v411, -inf
        %425 = vmax.xlane.f32.xlu0 %v424
        %v426 = vpop.xlane.xlu0 %425
        %v427 = vsub.f32 %v411, %v426
        %v428 = vmul.f32 %v427, 1.442695
        %v429 = vpow.pop %v428
        %v430 = vsel %vm420, %v429, 0.0
        %431 = vadd.xlane.f32.xlu0 %v430
        %v432 = vpop.xlane.xlu0 %431
        %v433 = vlog2.pop %v432
        %v434 = vmul.f32 %v433, 0.6931472
        %v435 = vadd.f32 %v426, %v434
        %v436 = vsub.f32 %v435, %v423
        %s437 = sadd.s32 %s27, %s28
        %s438 = smul.u32 %s437, 8
        %v439 = vlaneseq
        %v440 = vshrl.u32 %v439, 7
        %v441 = vstv %s438
        %v442 = vadd.s32 %v441, %v440
        %vm443 = vcmp.lt.s32.totalorder %v442, 4
        %v444 = vsel %vm443, %v436, 0.0
        %v445 = vld [vmem:[#allocation2] sm:$0xff]
        %v446 = vadd.f32 %v445, %v444
        %vm447 = vcmask 7168
        %448 = vst.msk [vmem:[#allocation2] sm:$0xff] %vm447, %v446
        %v449 = vld [vmem:[%s388] sm:$0xff]
        %v450 = vld [vmem:[%s394] sm:$0xff]
        %v451 = vlog2.pop %v449
        %v452 = vmul.f32 %v451, 0.6931472
        %v453 = vmax.f32 %v452, -100.0
        %v454 = vsub.f32 1.0, %v449
        %v455 = vlog2.pop %v454
        %v456 = vmul.f32 %v455, 0.6931472
        %v457 = vmax.f32 %v456, -100.0
        %v458 = vmul.f32 %v450, %v453
        %v459 = vsub.f32 1.0, %v450
        %v460 = vmul.f32 %v459, %v457
        %v461 = vadd.f32 %v458, %v460
        %v462 = vsub.f32 0.0, %v461
        %v463 = vld [vmem:[#allocation3] sm:$0x1]
        %v464 = vrot.slane %v462, 4
        %v465 = vadd.f32 %v462, %v464
        %v466 = vrot.slane %v465, 2
        %v467 = vadd.f32 %v465, %v466
        %v468 = vrot.slane %v467, 1
        %v469 = vadd.f32 %v467, %v468
        %v470 = vadd.f32 %v463, %v469
        %471 = vst [vmem:[#allocation3] sm:$0x1] %v470
        %v472 = vld [vmem:[%s400] sm:$0xff]
        %v473 = vld [vmem:[%s318] sm:$0xff]
        %v474 = vsub.f32 %v472, %v473
        %v475 = vld [vmem:[#allocation4] sm:$0x1]
        %v476 = vmul.f32 %v474, %v474
        %v477 = vrot.slane %v476, 4
        %v478 = vadd.f32 %v476, %v477
        %v479 = vrot.slane %v478, 2
        %v480 = vadd.f32 %v478, %v479
        %v481 = vrot.slane %v480, 1
        %v482 = vadd.f32 %v480, %v481
        %v483 = vadd.f32 %v475, %v482
        %484 = vst [vmem:[#allocation4] sm:$0x1] %v483
        // Predicated region
        $region53: #{tpu_custom_call.1} parent=43 // pred_check
          %p485 = pneg %p403
        $region54: #{tpu_custom_call.1} parent=43 // pred_check_branch
          %487 = sbr.rel (%p485) target = $region56
        $region55: #{tpu_custom_call.1} parent=43 // pred_region
          %vm488 = vcmp.eq.s32.totalorder %v440, 0
          %vm489 = vcmp.eq.s32.totalorder %v414, 0
          %vm490 = vmand %vm488, %vm489
          %v491 = vld [vmem:[#allocation2] sm:$0xff]
          %v492 = vsel %vm447, %v491, 0.0
          %493 = vadd.xlane.f32.xlu0 %v492
          %v494 = vpop.xlane.xlu0 %493
          %v495 = vrot.slane %v494, 4
          %v496 = vadd.f32 %v494, %v495
          %v497 = vrot.slane %v496, 2
          %v498 = vadd.f32 %v496, %v497
          %v499 = vrot.slane %v498, 1
          %v500 = vadd.f32 %v498, %v499
          %s501 = vtos %v500
          %v502 = vstv %s501
          %v503 = vsel %vm490, %v502, 0.0
          %vm504 = vcmp.eq.s32.totalorder %v414, 1
          %vm505 = vmand %vm488, %vm504
          %v506 = vld [vmem:[#allocation3] sm:$0x1]
          %vm507 = vcmask 1040384
          %v508 = vsel %vm507, %v506, 0.0
          %509 = vadd.xlane.f32.xlu0 %v508
          %v510 = vpop.xlane.xlu0 %509
          %v511 = vrot.slane %v510, 4
          %v512 = vadd.f32 %v510, %v511
          %v513 = vrot.slane %v512, 2
          %v514 = vadd.f32 %v512, %v513
          %v515 = vrot.slane %v514, 1
          %v516 = vadd.f32 %v514, %v515
          %s517 = vtos %v516
          %v518 = vstv %s517
          %v519 = vsel %vm505, %v518, %v503
          %vm520 = vcmp.eq.s32.totalorder %v414, 2
          %vm521 = vmand %vm488, %vm520
          %v522 = vld [vmem:[#allocation4] sm:$0x1]
          %v523 = vsel %vm507, %v522, 0.0
          %524 = vadd.xlane.f32.xlu0 %v523
          %v525 = vpop.xlane.xlu0 %524
          %v526 = vrot.slane %v525, 4
          %v527 = vadd.f32 %v525, %v526
          %v528 = vrot.slane %v527, 2
          %v529 = vadd.f32 %v527, %v528
          %v530 = vrot.slane %v529, 1
          %v531 = vadd.f32 %v529, %v530
          %s532 = vtos %v531
          %v533 = vstv %s532
          %v534 = vsel %vm521, %v533, %v519
          %535 = vst [vmem:[%s371] sm:$0xff] %v534
        $region56: #{tpu_custom_call.1} parent=43 // pred_fallthru
          _
        %s536 = sand.u32 %s211, 1
        %s537 = scalar_lea.sflag [#allocation7], %s536
        %s538 = sand.u32 %s211, 1
        %s539 = smul.addr %s538, 8
        %s540 = scalar_lea.vmem [#allocation8], %s539
        // Predicated region
        $region57: #{tpu_custom_call.1} parent=43 // pred_check
          %p541 = pneg %p221
        $region58: #{tpu_custom_call.1} parent=43 // pred_check_branch
          %543 = sbr.rel (%p541) target = $region60
        $region59: #{tpu_custom_call.1} parent=43 // pred_region
          %s545 = ssub.s32 128, 128
          %546 = vsyncadd %s537, %s545
          %s547 = smul.addr %s27, 128
          %s548 = scalar_lea.hbm %s6, %s547
          %s550 = sshll.u32 %s540, 4
          %s551 = int_to_ptr.vmem [resolvable:$true] %s550
          %553 = dma.vmem_to_hbm [thread:$0]  %s551, 128, %s548, %s537
        $region60: #{tpu_custom_call.1} parent=43 // pred_fallthru
          _
      $region44: #{tpu_custom_call.1} parent=5 // pred_fallthru
        _
      %p554 = scmp.le.s32.totalorder 2, %s18
      // Predicated region
      $region61: #{tpu_custom_call.1} parent=5 // pred_check
        %p555 = pneg %p554
      $region62: #{tpu_custom_call.1} parent=5 // pred_check_branch
        %557 = sbr.rel (%p555) target = $region64
      $region63: #{tpu_custom_call.1} parent=5 // pred_region
        %s558 = ssub.s32 %s18, 2
        // Predicated region
        $region65: #{tpu_custom_call.1} parent=63 // pred_check
          %p559 = pneg %p227
        $region66: #{tpu_custom_call.1} parent=63 // pred_check_branch
          %561 = sbr.rel (%p559) target = $region68
        $region67: #{tpu_custom_call.1} parent=63 // pred_region
          %s562 = sand.u32 %s212, 1
          %s563 = scalar_lea.sflag [#allocation7], %s562
          %s564 = sand.u32 %s212, 1
          %s565 = smul.addr %s564, 8
          %s566 = scalar_lea.vmem [#allocation8], %s565
          %567 = dma.done %s563, 128
        $region68: #{tpu_custom_call.1} parent=63 // pred_fallthru
          _
      $region64: #{tpu_custom_call.1} parent=5 // pred_fallthru
        _
    $region6: #{tpu_custom_call.1} parent=1 // loop_footer
      %s22 = sadd.s32 1, %s18
    $region7: #{tpu_custom_call.1} parent=1 // loop_footer_branch
      %17 = sbr.rel target = $region3
    $region8: #{tpu_custom_call.1} parent=1 // loop_exit
      _
    %568 = vsyncpa [#allocation6], 1
    %s569 = scalar_lea.sflag [#allocation6], 1
    %570 = vsyncpa %s569, 1
    %571 = vsyncpa [#allocation7], 1
    %s572 = scalar_lea.sflag [#allocation7], 1
    %573 = vsyncpa %s572, 1

</llo_original>
